<compile_context>
chip_gen: v6e
topology: v6e:2x2x1
jax: 0.10.0
libtpu: 0.0.40
codegen_flags: <defaults>
</compile_context>

<pallas_src>
import warnings

import jax
import jax.numpy as jnp
from jax import lax
from jax.experimental import pallas as pl
from jax.experimental.pallas import tpu as pltpu

LANES = 128
SUBLANES = 8


# ---------------------------------------------------------------------------
# Chip / tiling configuration
# ---------------------------------------------------------------------------
def _chip_config():
    """Generation-aware tile caps, scoped-VMEM limit and core split."""
    kind = ""
    try:
        kind = jax.devices()[0].device_kind.lower()
    except Exception:
        pass
    if "v7" in kind:
        # 64 MiB VMEM / 2 TensorCores per chip: cap tiles, keep 32 MiB scope,
        # split the reduce grid across both cores.
        return {"max_tile_rows": 4096, "vmem_limit": 32 * 1024 * 1024, "ncores": 2}
    if any(s in kind for s in ("v5e", "v5 lite", "v5lite", "v6e", "v6 lite", "v6lite")):
        # 128 MiB VMEM, single TensorCore: big tiles amortize per-step overhead.
        return {"max_tile_rows": 8192, "vmem_limit": 64 * 1024 * 1024, "ncores": 1}
    # Unknown / older generations: the previously validated conservative config.
    return {"max_tile_rows": 2048, "vmem_limit": 32 * 1024 * 1024, "ncores": 1}


def _round_up(x, m):
    return ((x + m - 1) // m) * m


def _cdiv(a, b):
    return (a + b - 1) // b


def _tiling(rows, itemsize, num_streams, cfg):
    """Pick a sublane-aligned tile height that fits the scoped-VMEM budget."""
    sublane_align = max(SUBLANES, 32 // max(itemsize, 1))   # f32:8 bf16:16 int8:32
    # Double-buffered stream windows + headroom for Mosaic's f32 temporaries.
    bytes_per_row = LANES * (2 * num_streams * itemsize + 4 * 4)
    rows_budget = int(cfg["vmem_limit"] * 0.75) // bytes_per_row
    rows_budget = max((rows_budget // sublane_align) * sublane_align, sublane_align)
    tile_rows = min(_round_up(rows, sublane_align), cfg["max_tile_rows"], rows_budget)
    num_tiles = _cdiv(rows, tile_rows)
    return tile_rows, num_tiles


# ---------------------------------------------------------------------------
# Reduce kernels (mean / sum)
# ---------------------------------------------------------------------------
def _make_weighted_reduce_kernel(inner, tile_rows, rows, need_mask, track_w):
    """sum((x-t)^2 * w) [and optionally sum(w)], finalized in-kernel."""

    def kernel(x_ref, t_ref, w_ref, *rest):
        if track_w:
            rst_out, w_out, acc_rst, acc_w = rest
        else:
            rst_out, acc_rst = rest
        i = pl.program_id(1)

        @pl.when(i == 0)
        def _init():
            acc_rst[...] = jnp.zeros_like(acc_rst)
            if track_w:
                acc_w[...] = jnp.zeros_like(acc_w)

        x = x_ref[...].astype(jnp.float32)
        t = t_ref[...].astype(jnp.float32)
        w = w_ref[...].astype(jnp.float32)
        d = x - t
        rst = d * d * w
        if need_mask:
            # Zero out rows past the logical end of the slab (ragged last tile
            # and the duplicated clamped tile of the core split).
            blk = pl.program_id(0) * inner + i
            row_ids = blk * tile_rows + lax.broadcasted_iota(
                jnp.int32, (tile_rows, 1), 0)
            valid = row_ids < rows
            rst = jnp.where(valid, rst, 0.0)
            if track_w:
                w = jnp.where(valid, w, 0.0)

        # Fold the (tile_rows, 128) tile onto an (8,128) vreg with VPU adds.
        acc_rst[...] += rst.reshape(-1, SUBLANES, LANES).sum(axis=0)
        if track_w:
            acc_w[...] += w.reshape(-1, SUBLANES, LANES).sum(axis=0)

        @pl.when(i == pl.num_programs(1) - 1)
        def _fin():
            # Collapse sublanes in-kernel; only a (1,128) lane-dense partial
            # per core leaves the kernel.
            rst_out[...] = acc_rst[...].sum(axis=0, keepdims=True).reshape(rst_out.shape)
            if track_w:
                w_out[...] = acc_w[...].sum(axis=0, keepdims=True).reshape(w_out.shape)

    return kernel


def _make_l1_reduce_kernel(inner, tile_rows, rows, need_mask):
    """sum(|x - t|) (weight=None path), finalized in-kernel."""

    def kernel(x_ref, t_ref, out_ref, acc):
        i = pl.program_id(1)

        @pl.when(i == 0)
        def _init():
            acc[...] = jnp.zeros_like(acc)

        x = x_ref[...].astype(jnp.float32)
        t = t_ref[...].astype(jnp.float32)
        a = jnp.abs(x - t)
        if need_mask:
            blk = pl.program_id(0) * inner + i
            row_ids = blk * tile_rows + lax.broadcasted_iota(
                jnp.int32, (tile_rows, 1), 0)
            a = jnp.where(row_ids < rows, a, 0.0)

        acc[...] += a.reshape(-1, SUBLANES, LANES).sum(axis=0)

        @pl.when(i == pl.num_programs(1) - 1)
        def _fin():
            out_ref[...] = acc[...].sum(axis=0, keepdims=True).reshape(out_ref.shape)

    return kernel


# ---------------------------------------------------------------------------
# Elementwise kernels (reduction='none')
# ---------------------------------------------------------------------------
def _wmse_elem_kernel(x_ref, t_ref, w_ref, o_ref):
    x = x_ref[...].astype(jnp.float32)
    t = t_ref[...].astype(jnp.float32)
    w = w_ref[...].astype(jnp.float32)
    d = x - t
    o_ref[...] = (d * d * w).astype(o_ref.dtype)


def _l1_elem_kernel(x_ref, t_ref, o_ref):
    x = x_ref[...].astype(jnp.float32)
    t = t_ref[...].astype(jnp.float32)
    o_ref[...] = jnp.abs(x - t).astype(o_ref.dtype)


# ---------------------------------------------------------------------------
# Public entry point
# ---------------------------------------------------------------------------
def weighted_mse_loss(inp, target, weight=None, reduction="mean"):
    if reduction not in ("mean", "sum", "none"):
        raise ValueError(f"unknown reduction: {reduction}")

    weighted = weight is not None
    if weighted and not (inp.shape == target.shape == weight.shape):
        warnings.warn(
            "Input size ({}) is different from the target size ({}) or weight "
            "size ({}). This will likely lead to incorrect results due to "
            "broadcasting. Please ensure they have the same size.".format(
                inp.shape, target.shape, weight.shape))
        # TODO(synk): PyTorch would broadcast mismatched shapes; this
        # implementation requires input/target/weight to have equal shapes.

    orig_shape = inp.shape
    orig_dtype = inp.dtype
    n = inp.size
    cfg = _chip_config()
    itemsize = jnp.dtype(orig_dtype).itemsize

    rows = _cdiv(n, LANES)                 # logical rows of the (rows,128) slab
    lane_pad = rows * LANES - n            # 0..127 ragged tail

    arrays = [inp, target] + ([weight] if weighted else [])

    def to_slab(a):
        flat = a.reshape(-1)
        if lane_pad:
            # Only a sub-128-element ragged tail forces a padded copy; the
            # common lane-aligned case is a free reshape (no HBM traffic).
            # TODO(synk): a manual-DMA (memory_space=pl.ANY) path could drop
            # this last copy for fully general n.
            flat = jnp.pad(flat, (0, lane_pad))
        return flat.reshape(rows, LANES)

    slabs = [to_slab(a) for a in arrays]

    # ------------------------------------------------------------------ none
    if reduction == "none":
        n_streams = len(slabs) + 1          # inputs + output, all double-buffered
        tile_rows, num_tiles = _tiling(rows, itemsize, n_streams, cfg)
        kernel = _wmse_elem_kernel if weighted else _l1_elem_kernel

        out = pl.pallas_call(
            kernel,
            out_shape=jax.ShapeDtypeStruct((rows, LANES), orig_dtype),
            grid_spec=pltpu.PrefetchScalarGridSpec(
                num_scalar_prefetch=0,
                grid=(num_tiles,),
                in_specs=[pl.BlockSpec((tile_rows, LANES), lambda i: (i, 0))
                          ] * len(slabs),
                out_specs=pl.BlockSpec((tile_rows, LANES), lambda i: (i, 0)),
            ),
            compiler_params=pltpu.CompilerParams(
                dimension_semantics=("parallel",),
                vmem_limit_bytes=cfg["vmem_limit"]),
        )(*slabs)
        if lane_pad:
            # TODO(synk): ragged tail forces an unpad slice (one extra copy).
            return out.reshape(-1)[:n].reshape(orig_shape)
        return out.reshape(orig_shape)

    # ---------------------------------------------------------- mean / sum
    n_streams = len(slabs)
    tile_rows, num_tiles = _tiling(rows, itemsize, n_streams, cfg)
    ncores = min(cfg["ncores"], num_tiles)          # 2 only on v7x with >=2 tiles
    inner = _cdiv(num_tiles, ncores)
    covered = ncores * inner
    need_mask = (rows % tile_rows != 0) or (covered != num_tiles)

    if covered == num_tiles:
        def in_map(c, i):
            return (c * inner + i, 0)
    else:
        last = num_tiles - 1

        def in_map(c, i):
            # Clamp the (at most one) overhang block of the core split onto the
            # last real tile; its contribution is masked to zero in the kernel.
            return (jnp.minimum(c * inner + i, last), 0)

    in_specs = [pl.BlockSpec((tile_rows, LANES), in_map)] * n_streams
    part_spec = pl.BlockSpec((1, 1, LANES), lambda c, i: (c, 0, 0))
    part_shape = jax.ShapeDtypeStruct((ncores, 1, LANES), jnp.float32)
    acc_spec = pltpu.VMEM((SUBLANES, LANES), jnp.float32)
    cparams = pltpu.CompilerParams(
        dimension_semantics=("parallel", "arbitrary"),
        vmem_limit_bytes=cfg["vmem_limit"])

    def run(kernel, num_outs):
        return pl.pallas_call(
            kernel,
            out_shape=(tuple([part_shape] * num_outs) if num_outs > 1
                       else part_shape),
            grid_spec=pltpu.PrefetchScalarGridSpec(
                num_scalar_prefetch=0,
                grid=(ncores, inner),
                in_specs=in_specs,
                out_specs=([part_spec] * num_outs if num_outs > 1
                           else part_spec),
                scratch_shapes=[acc_spec] * num_outs,
            ),
            compiler_params=cparams,
        )(*slabs)

    if weighted:
        if reduction == "mean":
            kern = _make_weighted_reduce_kernel(inner, tile_rows, rows,
                                                need_mask, track_w=True)
            part_rst, part_w = run(kern, 2)
            return (jnp.sum(part_rst) / jnp.sum(part_w)).astype(orig_dtype)
        # 'sum' never needs sum(weight): dedicated kernel without acc_w.
        kern = _make_weighted_reduce_kernel(inner, tile_rows, rows,
                                            need_mask, track_w=False)
        part_rst = run(kern, 1)
        return jnp.sum(part_rst).astype(orig_dtype)

    # weight is None -> plain L1 loss (only 2 input streams)
    kern = _make_l1_reduce_kernel(inner, tile_rows, rows, need_mask)
    part = run(kern, 1)
    total = jnp.sum(part)
    if reduction == "mean":
        return (total / n).astype(orig_dtype)       # F.l1_loss mean: / numel
    return total.astype(orig_dtype)


# ---------------------------------------------------------------------------
# Demo / self-check
# ---------------------------------------------------------------------------
if __name__ == "__main__":
    key = jax.random.PRNGKey(0)
    k1, k2, k3 = jax.random.split(key, 3)

    shape = (2, 4, 16, 16)   # NCHW demo input, n = 2048 (lane aligned: no padding)
    inp = jax.random.normal(k1, shape, dtype=jnp.float32)
    target = jax.random.normal(k2, shape, dtype=jnp.float32)
    weight = jax.random.uniform(k3, shape, dtype=jnp.float32)

    # Weighted path
    loss_mean = weighted_mse_loss(inp, target, weight, reduction="mean")
    loss_sum = weighted_mse_loss(inp, target, weight, reduction="sum")
    loss_none = weighted_mse_loss(inp, target, weight, reduction="none")
    # Unweighted path (falls back to L1 loss, as in the PyTorch module)
    loss_l1_mean = weighted_mse_loss(inp, target, None, reduction="mean")
    loss_l1_sum = weighted_mse_loss(inp, target, None, reduction="sum")
    loss_l1_none = weighted_mse_loss(inp, target, None, reduction="none")

    # Ragged case (n = 7*37 = 259): exercises the in-kernel row mask.
    rshape = (7, 37)
    ri = jax.random.normal(k1, rshape, dtype=jnp.float32)
    rt = jax.random.normal(k2, rshape, dtype=jnp.float32)
    rw = jax.random.uniform(k3, rshape, dtype=jnp.float32)
    rloss_mean = weighted_mse_loss(ri, rt, rw, reduction="mean")
    rloss_none = weighted_mse_loss(ri, rt, rw, reduction="none")
    rloss_l1 = weighted_mse_loss(ri, rt, None, reduction="mean")

    jax.block_until_ready((loss_mean, loss_sum, loss_none, loss_l1_mean,
                           loss_l1_sum, loss_l1_none, rloss_mean, rloss_none,
                           rloss_l1))

    # Reference checks against plain JAX
    ref_elem = (inp - target) ** 2 * weight
    ref_l1 = jnp.abs(inp - target)
    assert jnp.allclose(loss_mean, jnp.sum(ref_elem) / jnp.sum(weight),
                        rtol=1e-5, atol=1e-5)
    assert jnp.allclose(loss_sum, jnp.sum(ref_elem), rtol=1e-5, atol=1e-5)
    assert jnp.allclose(loss_none, ref_elem, rtol=1e-5, atol=1e-5)
    assert jnp.allclose(loss_l1_mean, jnp.mean(ref_l1), rtol=1e-5, atol=1e-5)
    assert jnp.allclose(loss_l1_sum, jnp.sum(ref_l1), rtol=1e-5, atol=1e-5)
    assert jnp.allclose(loss_l1_none, ref_l1, rtol=1e-5, atol=1e-5)

    rref_elem = (ri - rt) ** 2 * rw
    assert jnp.allclose(rloss_mean, jnp.sum(rref_elem) / jnp.sum(rw),
                        rtol=1e-5, atol=1e-5)
    assert jnp.allclose(rloss_none, rref_elem, rtol=1e-5, atol=1e-5)
    assert jnp.allclose(rloss_l1, jnp.mean(jnp.abs(ri - rt)),
                        rtol=1e-5, atol=1e-5)

    print("KERNEL_OK")
</pallas_src>

<mosaic_0001>
module attributes {stable_mosaic.version = 11 : i64} {
  func.func @kernel(%arg0: i32, %arg1: i32, %arg2: memref<16x128xf32, #tpu.memory_space<vmem>>, %arg3: memref<16x128xf32, #tpu.memory_space<vmem>>, %arg4: memref<16x128xf32, #tpu.memory_space<vmem>>, %arg5: memref<1x1x128xf32, #tpu.memory_space<vmem>>, %arg6: memref<1x1x128xf32, #tpu.memory_space<vmem>>, %arg7: memref<8x128xf32, #tpu.memory_space<vmem>>, %arg8: memref<8x128xf32, #tpu.memory_space<vmem>>) attributes {dimension_semantics = [#tpu.dimension_semantics<parallel>, #tpu.dimension_semantics<arbitrary>], iteration_bounds = array<i64: 1, 1>, scalar_prefetch = 0 : i64, scratch_operands = 2 : i64, tpu.core_type = #tpu.core_type<tc>, window_params = [{transform_indices = @transform_0, window_bounds = array<i64: 16, 128>}, {transform_indices = @transform_1, window_bounds = array<i64: 16, 128>}, {transform_indices = @transform_2, window_bounds = array<i64: 16, 128>}, {transform_indices = @transform_3, window_bounds = array<i64: 1, 1, 128>}, {transform_indices = @transform_4, window_bounds = array<i64: 1, 1, 128>}]} {
    %c0_i32 = arith.constant 0 : i32
    %0 = arith.cmpi eq, %arg1, %c0_i32 : i32
    %1 = arith.extui %0 : i1 to i32
    %c0_i32_0 = arith.constant 0 : i32
    %2 = arith.cmpi ne, %1, %c0_i32_0 : i32
    scf.if %2 {
      %cst_17 = arith.constant 0.000000e+00 : f32
      %22 = vector.broadcast %cst_17 : f32 to vector<8x128xf32>
      %c0_18 = arith.constant 0 : index
      %c0_19 = arith.constant 0 : index
      %23 = vector.load %arg7[%c0_18, %c0_19] : memref<8x128xf32, #tpu.memory_space<vmem>>, vector<8x128xf32>
      tpu.vector_store %arg7[%c0_18, %c0_19], %22 {strides = array<i32>} : memref<8x128xf32, #tpu.memory_space<vmem>>, vector<8x128xf32>,
      %cst_20 = arith.constant 0.000000e+00 : f32
      %24 = vector.broadcast %cst_20 : f32 to vector<8x128xf32>
      %c0_21 = arith.constant 0 : index
      %c0_22 = arith.constant 0 : index
      %25 = vector.load %arg8[%c0_21, %c0_22] : memref<8x128xf32, #tpu.memory_space<vmem>>, vector<8x128xf32>
      tpu.vector_store %arg8[%c0_21, %c0_22], %24 {strides = array<i32>} : memref<8x128xf32, #tpu.memory_space<vmem>>, vector<8x128xf32>,
    } else {
    }
    %c0 = arith.constant 0 : index
    %c0_1 = arith.constant 0 : index
    %3 = vector.load %arg2[%c0, %c0_1] : memref<16x128xf32, #tpu.memory_space<vmem>>, vector<16x128xf32>
    %c0_2 = arith.constant 0 : index
    %c0_3 = arith.constant 0 : index
    %4 = vector.load %arg3[%c0_2, %c0_3] : memref<16x128xf32, #tpu.memory_space<vmem>>, vector<16x128xf32>
    %c0_4 = arith.constant 0 : index
    %c0_5 = arith.constant 0 : index
    %5 = vector.load %arg4[%c0_4, %c0_5] : memref<16x128xf32, #tpu.memory_space<vmem>>, vector<16x128xf32>
    %6 = arith.subf %3, %4 : vector<16x128xf32>
    %7 = arith.mulf %6, %6 : vector<16x128xf32>
    %8 = arith.mulf %7, %5 : vector<16x128xf32>
    %c0_6 = arith.constant 0 : index
    %c0_7 = arith.constant 0 : index
    %9 = vector.load %arg7[%c0_6, %c0_7] : memref<8x128xf32, #tpu.memory_space<vmem>>, vector<8x128xf32>
    %10 = vector.shape_cast %8 : vector<16x128xf32> to vector<2x8x128xf32>
    %cst = arith.constant dense<0.000000e+00> : vector<8x128xf32>
    %11 = vector.multi_reduction <add>, %10, %cst [0] : vector<2x8x128xf32> to vector<8x128xf32>
    %12 = arith.addf %9, %11 : vector<8x128xf32>
    %c0_8 = arith.constant 0 : index
    %c0_9 = arith.constant 0 : index
    %13 = vector.load %arg7[%c0_8, %c0_9] : memref<8x128xf32, #tpu.memory_space<vmem>>, vector<8x128xf32>
    tpu.vector_store %arg7[%c0_8, %c0_9], %12 {strides = array<i32>} : memref<8x128xf32, #tpu.memory_space<vmem>>, vector<8x128xf32>,
    %c0_10 = arith.constant 0 : index
    %c0_11 = arith.constant 0 : index
    %14 = vector.load %arg8[%c0_10, %c0_11] : memref<8x128xf32, #tpu.memory_space<vmem>>, vector<8x128xf32>
    %15 = vector.shape_cast %5 : vector<16x128xf32> to vector<2x8x128xf32>
    %cst_12 = arith.constant dense<0.000000e+00> : vector<8x128xf32>
    %16 = vector.multi_reduction <add>, %15, %cst_12 [0] : vector<2x8x128xf32> to vector<8x128xf32>
    %17 = arith.addf %14, %16 : vector<8x128xf32>
    %c0_13 = arith.constant 0 : index
    %c0_14 = arith.constant 0 : index
    %18 = vector.load %arg8[%c0_13, %c0_14] : memref<8x128xf32, #tpu.memory_space<vmem>>, vector<8x128xf32>
    tpu.vector_store %arg8[%c0_13, %c0_14], %17 {strides = array<i32>} : memref<8x128xf32, #tpu.memory_space<vmem>>, vector<8x128xf32>,
    %c0_i32_15 = arith.constant 0 : i32
    %19 = arith.cmpi eq, %arg1, %c0_i32_15 : i32
    %20 = arith.extui %19 : i1 to i32
    %c0_i32_16 = arith.constant 0 : i32
    %21 = arith.cmpi ne, %20, %c0_i32_16 : i32
    scf.if %21 {
      %c0_17 = arith.constant 0 : index
      %c0_18 = arith.constant 0 : index
      %22 = vector.load %arg7[%c0_17, %c0_18] : memref<8x128xf32, #tpu.memory_space<vmem>>, vector<8x128xf32>
      %cst_19 = arith.constant dense<0.000000e+00> : vector<128xf32>
      %23 = vector.multi_reduction <add>, %22, %cst_19 [0] : vector<8x128xf32> to vector<128xf32>
      %24 = vector.shape_cast %23 : vector<128xf32> to vector<1x128xf32>
      %25 = vector.shape_cast %24 : vector<1x128xf32> to vector<1x1x128xf32>
      %c0_20 = arith.constant 0 : index
      %c0_21 = arith.constant 0 : index
      %c0_22 = arith.constant 0 : index
      %26 = vector.load %arg5[%c0_20, %c0_21, %c0_22] : memref<1x1x128xf32, #tpu.memory_space<vmem>>, vector<1x1x128xf32>
      tpu.vector_store %arg5[%c0_20, %c0_21, %c0_22], %25 {strides = array<i32>} : memref<1x1x128xf32, #tpu.memory_space<vmem>>, vector<1x1x128xf32>,
      %c0_23 = arith.constant 0 : index
      %c0_24 = arith.constant 0 : index
      %27 = vector.load %arg8[%c0_23, %c0_24] : memref<8x128xf32, #tpu.memory_space<vmem>>, vector<8x128xf32>
      %cst_25 = arith.constant dense<0.000000e+00> : vector<128xf32>
      %28 = vector.multi_reduction <add>, %27, %cst_25 [0] : vector<8x128xf32> to vector<128xf32>
      %29 = vector.shape_cast %28 : vector<128xf32> to vector<1x128xf32>
      %30 = vector.shape_cast %29 : vector<1x128xf32> to vector<1x1x128xf32>
      %c0_26 = arith.constant 0 : index
      %c0_27 = arith.constant 0 : index
      %c0_28 = arith.constant 0 : index
      %31 = vector.load %arg6[%c0_26, %c0_27, %c0_28] : memref<1x1x128xf32, #tpu.memory_space<vmem>>, vector<1x1x128xf32>
      tpu.vector_store %arg6[%c0_26, %c0_27, %c0_28], %30 {strides = array<i32>} : memref<1x1x128xf32, #tpu.memory_space<vmem>>, vector<1x1x128xf32>,
    } else {
    }
    return
  }
  func.func @transform_0(%arg0: i32, %arg1: i32) -> (i32, i32) {
    %c1_i32 = arith.constant 1 : i32
    %0 = arith.muli %arg0, %c1_i32 : i32
    %1 = arith.addi %0, %arg1 : i32
    %c0_i32 = arith.constant 0 : i32
    %c0_i32_0 = arith.constant 0 : i32
    return %1, %c0_i32 : i32, i32
  }
  func.func @transform_1(%arg0: i32, %arg1: i32) -> (i32, i32) {
    %c1_i32 = arith.constant 1 : i32
    %0 = arith.muli %arg0, %c1_i32 : i32
    %1 = arith.addi %0, %arg1 : i32
    %c0_i32 = arith.constant 0 : i32
    %c0_i32_0 = arith.constant 0 : i32
    return %1, %c0_i32 : i32, i32
  }
  func.func @transform_2(%arg0: i32, %arg1: i32) -> (i32, i32) {
    %c1_i32 = arith.constant 1 : i32
    %0 = arith.muli %arg0, %c1_i32 : i32
    %1 = arith.addi %0, %arg1 : i32
    %c0_i32 = arith.constant 0 : i32
    %c0_i32_0 = arith.constant 0 : i32
    return %1, %c0_i32 : i32, i32
  }
  func.func @transform_3(%arg0: i32, %arg1: i32) -> (i32, i32, i32) {
    %c0_i32 = arith.constant 0 : i32
    %c0_i32_0 = arith.constant 0 : i32
    %c0_i32_1 = arith.constant 0 : i32
    return %arg0, %c0_i32, %c0_i32_0 : i32, i32, i32
  }
  func.func @transform_4(%arg0: i32, %arg1: i32) -> (i32, i32, i32) {
    %c0_i32 = arith.constant 0 : i32
    %c0_i32_0 = arith.constant 0 : i32
    %c0_i32_1 = arith.constant 0 : i32
    return %arg0, %c0_i32, %c0_i32_0 : i32, i32, i32
  }
}

</mosaic_0001>

<llo_original>
// kernel: tpu_custom_call.1
$region0: #{tpu_custom_call.1}
  #allocation0 [shape = 'u32[]', space=smem, size = 0x4, offset = 0x4, fixed_abs, tag = 'smem constant byte address 0x4 - core index']
  #allocation1 [shape = 'u32[144,128]{1,0:T(1,128)}', space=vmem, size = 0x12000, scoped, tag = 'internal scratch']
  #allocation2 [shape = 'f32[8,128]{1,0:T(8,128)}', space=vmem, size = 0x1000, scoped, tag = 'scratch operand']
  #allocation3 [shape = 'f32[8,128]{1,0:T(8,128)}', space=vmem, size = 0x1000, scoped, tag = 'scratch operand']
  %s0 = inlined_call_operand.hbm [shape: f32[16,128], index: 0, kind: input, shape index: {}]
  %s1 = inlined_call_operand.hbm [shape: f32[16,128], index: 1, kind: input, shape index: {}]
  %s2 = inlined_call_operand.hbm [shape: f32[16,128], index: 2, kind: input, shape index: {}]
  %s3 = inlined_call_operand.hbm [shape: f32[1,1,128], index: 3, kind: output, shape index: {0}]
  %s4 = inlined_call_operand.hbm [shape: f32[1,1,128], index: 4, kind: output, shape index: {1}]
  %5 = xla_tuple %s3, %s4
  %s6 = sld [smem:[#allocation0]]
  $region50: #{tpu_custom_call.1} parent=0
    _
  %s8 = ssub.s32 1, %s6
  %s9 = scalar_select 0, %s8, %s6
  $region1: #{tpu_custom_call.1} parent=0
    #allocation4 [shape = 'u8[8192]{0}', space=vmem, size = 0x2000, scoped, tag = 'input window, operand 0, single buffered']
    #allocation5 [shape = 's32[1]{0}', space=sflag, size = 0x4, scoped, tag = 'scoped memory for tpu_custom_call.1']
    #allocation6 [shape = 's32[1]{0}', space=sflag, size = 0x4, scoped, tag = 'scoped memory for tpu_custom_call.1']
    #allocation7 [shape = 'u8[8192]{0}', space=vmem, size = 0x2000, scoped, tag = 'input window, operand 1, single buffered']
    #allocation8 [shape = 's32[1]{0}', space=sflag, size = 0x4, scoped, tag = 'scoped memory for tpu_custom_call.1']
    #allocation9 [shape = 'u8[8192]{0}', space=vmem, size = 0x2000, scoped, tag = 'input window, operand 2, single buffered']
    #allocation10 [shape = 'u8[512]{0}', space=vmem, size = 0x400, scoped, tag = 'output window, operand 0, single buffered']
    #allocation11 [shape = 'u8[512]{0}', space=vmem, size = 0x400, scoped, tag = 'output window, operand 1, single buffered']
    #allocation12 [shape = 's32[1]{0}', space=sflag, size = 0x4, scoped, tag = 'scoped memory for tpu_custom_call.1']
    %10 = vsyncpa [#allocation5], 0
    %11 = vsyncpa [#allocation8], 0
    %12 = vsyncpa [#allocation6], 0
    %13 = vsyncpa [#allocation12], 0
    // Predicated region
    $region2: #{tpu_custom_call.1} parent=1 // pred_check
      _
    $region3: #{tpu_custom_call.1} parent=1 // pred_check_branch
      %15 = sbr.rel (0) target = $region5
    $region4: #{tpu_custom_call.1} parent=1 // pred_region
      %s16 = sadd.s32 0, 0
      %s17 = smul.u32 2, %s16
      %s19 = ssub.s32 256, 256
      %20 = vsyncadd [#allocation5], %s19
      %s21 = smul.addr %s17, 128
      %s22 = scalar_lea.hbm %s0, %s21
      %s23 = sshll.u32 [#allocation4], 4
      %s24 = int_to_ptr.vmem [resolvable:$true] %s23
      %29 = dma.hbm_to_vmem [thread:$0]  %s22, 256, %s24, [#allocation5], 128, 128, 8
    $region5: #{tpu_custom_call.1} parent=1 // pred_fallthru
      _
    // Predicated region
    $region6: #{tpu_custom_call.1} parent=1 // pred_check
      _
    $region7: #{tpu_custom_call.1} parent=1 // pred_check_branch
      %31 = sbr.rel (0) target = $region9
    $region8: #{tpu_custom_call.1} parent=1 // pred_region
      %s32 = sadd.s32 0, 0
      %s33 = smul.u32 2, %s32
      %s35 = ssub.s32 256, 256
      %36 = vsyncadd [#allocation8], %s35
      %s37 = smul.addr %s33, 128
      %s38 = scalar_lea.hbm %s1, %s37
      %s39 = sshll.u32 [#allocation7], 4
      %s40 = int_to_ptr.vmem [resolvable:$true] %s39
      %45 = dma.hbm_to_vmem [thread:$0]  %s38, 256, %s40, [#allocation8], 128, 128, 8
    $region9: #{tpu_custom_call.1} parent=1 // pred_fallthru
      _
    // Predicated region
    $region10: #{tpu_custom_call.1} parent=1 // pred_check
      _
    $region11: #{tpu_custom_call.1} parent=1 // pred_check_branch
      %47 = sbr.rel (0) target = $region13
    $region12: #{tpu_custom_call.1} parent=1 // pred_region
      %s48 = sadd.s32 0, 0
      %s49 = smul.u32 2, %s48
      %s51 = ssub.s32 256, 256
      %52 = vsyncadd [#allocation8], %s51
      %s53 = smul.addr %s49, 128
      %s54 = scalar_lea.hbm %s2, %s53
      %s55 = sshll.u32 [#allocation9], 4
      %s56 = int_to_ptr.vmem [resolvable:$true] %s55
      %61 = dma.hbm_to_vmem [thread:$0]  %s54, 256, %s56, [#allocation8], 128, 128, 8
    $region13: #{tpu_custom_call.1} parent=1 // pred_fallthru
      _
    // Predicated region
    $region14: #{tpu_custom_call.1} parent=1 // pred_check
      _
    $region15: #{tpu_custom_call.1} parent=1 // pred_check_branch
      %63 = sbr.rel (0) target = $region17
    $region16: #{tpu_custom_call.1} parent=1 // pred_region
      %64 = dma.done [#allocation5], 256
    $region17: #{tpu_custom_call.1} parent=1 // pred_fallthru
      _
    // Predicated region
    $region18: #{tpu_custom_call.1} parent=1 // pred_check
      _
    $region19: #{tpu_custom_call.1} parent=1 // pred_check_branch
      %66 = sbr.rel (0) target = $region21
    $region20: #{tpu_custom_call.1} parent=1 // pred_region
      %67 = dma.done [#allocation8], 256
    $region21: #{tpu_custom_call.1} parent=1 // pred_fallthru
      _
    // Predicated region
    $region22: #{tpu_custom_call.1} parent=1 // pred_check
      _
    $region23: #{tpu_custom_call.1} parent=1 // pred_check_branch
      %69 = sbr.rel (0) target = $region25
    $region24: #{tpu_custom_call.1} parent=1 // pred_region
      %70 = dma.done [#allocation8], 256
    $region25: #{tpu_custom_call.1} parent=1 // pred_fallthru
      _
    %s71 = sadd.s32 0, 0
    %s72 = smul.u32 2, %s71
    %s73 = sadd.s32 0, 0
    %s74 = smul.u32 2, %s73
    %s75 = sadd.s32 0, 0
    %s76 = smul.u32 2, %s75
    %p77 = scmp.eq.s32.totalorder 0, 0
    // Predicated region
    $region26: #{tpu_custom_call.1} parent=1 // pred_check
      %p78 = pneg %p77
    $region27: #{tpu_custom_call.1} parent=1 // pred_check_branch
      %80 = sbr.rel (%p78) target = $region29
    $region28: #{tpu_custom_call.1} parent=1 // pred_region
      %81 = vst [vmem:[#allocation2] sm:$0xff] 0.0
      %82 = vst [vmem:[#allocation3] sm:$0xff] 0.0
    $region29: #{tpu_custom_call.1} parent=1 // pred_fallthru
      _
    %v83 = vld [vmem:[#allocation4] sm:$0xff]
    %v84 = vld [vmem:[#allocation4 + $0x8] sm:$0xff]
    %v85 = vld [vmem:[#allocation7] sm:$0xff]
    %v86 = vld [vmem:[#allocation7 + $0x8] sm:$0xff]
    %v87 = vld [vmem:[#allocation9] sm:$0xff]
    %v88 = vld [vmem:[#allocation9 + $0x8] sm:$0xff]
    %v89 = vsub.f32 %v83, %v85
    %v90 = vsub.f32 %v84, %v86
    %v91 = vmul.f32 %v89, %v89
    %v92 = vmul.f32 %v90, %v90
    %v93 = vmul.f32 %v91, %v87
    %v94 = vmul.f32 %v92, %v88
    %v95 = vld [vmem:[#allocation2] sm:$0xff]
    %v96 = vadd.f32 %v93, %v94
    %v97 = vadd.f32 %v95, %v96
    %98 = vst [vmem:[#allocation2] sm:$0xff] %v97
    %v99 = vld [vmem:[#allocation3] sm:$0xff]
    %v100 = vadd.f32 %v87, %v88
    %v101 = vadd.f32 %v99, %v100
    %102 = vst [vmem:[#allocation3] sm:$0xff] %v101
    // Predicated region
    $region30: #{tpu_custom_call.1} parent=1 // pred_check
      %p103 = pneg %p77
    $region31: #{tpu_custom_call.1} parent=1 // pred_check_branch
      %105 = sbr.rel (%p103) target = $region33
    $region32: #{tpu_custom_call.1} parent=1 // pred_region
      %v106 = vld [vmem:[#allocation2] sm:$0xff]
      %v107 = vrot.slane %v106, 4
      %v108 = vadd.f32 %v106, %v107
      %v109 = vrot.slane %v108, 2
      %v110 = vadd.f32 %v108, %v109
      %v111 = vrot.slane %v110, 1
      %v112 = vadd.f32 %v110, %v111
      %113 = vst [vmem:[#allocation10] sm:$0x1] %v112
      %v114 = vld [vmem:[#allocation3] sm:$0xff]
      %v115 = vrot.slane %v114, 4
      %v116 = vadd.f32 %v114, %v115
      %v117 = vrot.slane %v116, 2
      %v118 = vadd.f32 %v116, %v117
      %v119 = vrot.slane %v118, 1
      %v120 = vadd.f32 %v118, %v119
      %121 = vst [vmem:[#allocation11] sm:$0x1] %v120
    $region33: #{tpu_custom_call.1} parent=1 // pred_fallthru
      _
    // Predicated region
    $region34: #{tpu_custom_call.1} parent=1 // pred_check
      _
    $region35: #{tpu_custom_call.1} parent=1 // pred_check_branch
      %123 = sbr.rel (0) target = $region37
    $region36: #{tpu_custom_call.1} parent=1 // pred_region
      %s125 = ssub.s32 16, 16
      %126 = vsyncadd [#allocation6], %s125
      %s128 = sshll.u32 [#allocation10], 4
      %s129 = int_to_ptr.vmem [resolvable:$true] %s128
      %131 = dma.vmem_to_hbm [thread:$0]  %s129, 16, %s3, [#allocation6]
    $region37: #{tpu_custom_call.1} parent=1 // pred_fallthru
      _
    // Predicated region
    $region38: #{tpu_custom_call.1} parent=1 // pred_check
      _
    $region39: #{tpu_custom_call.1} parent=1 // pred_check_branch
      %133 = sbr.rel (0) target = $region41
    $region40: #{tpu_custom_call.1} parent=1 // pred_region
      %s135 = ssub.s32 16, 16
      %136 = vsyncadd [#allocation12], %s135
      %s138 = sshll.u32 [#allocation11], 4
      %s139 = int_to_ptr.vmem [resolvable:$true] %s138
      %141 = dma.vmem_to_hbm [thread:$0]  %s139, 16, %s4, [#allocation12]
    $region41: #{tpu_custom_call.1} parent=1 // pred_fallthru
      _
    // Predicated region
    $region42: #{tpu_custom_call.1} parent=1 // pred_check
      _
    $region43: #{tpu_custom_call.1} parent=1 // pred_check_branch
      %143 = sbr.rel (0) target = $region45
    $region44: #{tpu_custom_call.1} parent=1 // pred_region
      %144 = dma.done [#allocation6], 16
    $region45: #{tpu_custom_call.1} parent=1 // pred_fallthru
      _
    // Predicated region
    $region46: #{tpu_custom_call.1} parent=1 // pred_check
      _
    $region47: #{tpu_custom_call.1} parent=1 // pred_check_branch
      %146 = sbr.rel (0) target = $region49
    $region48: #{tpu_custom_call.1} parent=1 // pred_region
      %147 = dma.done [#allocation12], 16
    $region49: #{tpu_custom_call.1} parent=1 // pred_fallthru
      _
    %148 = vsyncpa [#allocation5], 1
    %149 = vsyncpa [#allocation8], 1
    %150 = vsyncpa [#allocation6], 1
    %151 = vsyncpa [#allocation12], 1

</llo_original>
